<compile_context>
chip_gen: v7x
topology: tpu7x:2x2x1
jax: 0.10.0
libtpu: 0.0.40
codegen_flags: <defaults>
</compile_context>

<pallas_src>
import functools

import jax
import jax.numpy as jnp
from jax.experimental import pallas as pl
from jax.experimental.pallas import tpu as pltpu

EPS = 1e-5
LANE = 128


# ---------------------------------------------------------------------------
# Hardware-aware sizing helpers
# ---------------------------------------------------------------------------

def _vmem_limit_bytes():
    """Generation-aware VMEM limit: ~3/4 of physical, capped at 64 MiB.
    v5e/v6e (128 MiB physical) -> 64 MiB; v7x (64 MiB physical) -> 48 MiB."""
    try:
        cap = int(getattr(pltpu.get_tpu_info(), "vmem_capacity_bytes", 0)) or None
    except Exception:
        cap = None
    if cap is None:
        cap = 64 * 1024 * 1024            # unknown chip: assume the small (v7x) VMEM
    return min(64 * 1024 * 1024, (cap * 3) // 4)


def _round_up(a, b):
    return -(-a // b) * b


def _pick_tile(S, C, vmem_limit, requested=None):
    """Return (tile_s, padded_S).

    tile_s is a multiple of 128 (or the full extent S) sized so the
    double-buffered x/out blocks stay well inside the VMEM limit.  If S has no
    usable multiple-of-128 divisor we pad S up and mask the tail in the stats
    kernels (the caller handles the zero-padding / final slice)."""
    if requested is not None:
        if requested == S:
            return S, S
        if requested <= 0 or requested % LANE != 0:
            raise ValueError(
                f"tile_s={requested} must be a positive multiple of {LANE} or equal S={S}")
        return requested, _round_up(S, requested)

    # Keep ~4 in-flight (1, C, tile_s) f32 blocks (double-buffered in + out)
    # under half the VMEM limit; cap at 32K lanes (diminishing returns beyond).
    per_block = (vmem_limit // 2) // 4
    max_tile = min(32 * 1024, max(LANE, (per_block // (C * 4)) // LANE * LANE))

    if S <= max_tile:
        return S, S                       # full-extent block is always layout-legal

    best = 0
    if S % LANE == 0:                     # largest multiple-of-128 divisor <= max_tile
        t = max_tile
        while t >= LANE:
            if S % t == 0:
                best = t
                break
            t -= LANE
    if best >= max(LANE, max_tile // 4):
        return best, S                    # good exact tiling, no padding
    # Awkward S: pad to a large tile and mask the tail (avoids tiny tiles and the
    # old VMEM-blowing tile_s = S fallback).
    return max_tile, _round_up(S, max_tile)


# ---------------------------------------------------------------------------
# Fused fast path: whole activation resident in VMEM, single pallas_call.
# ---------------------------------------------------------------------------

def _fused_kernel(x_ref, w1_ref, w2_ref, g1_ref, b1_ref, g2_ref, b2_ref, o_ref):
    n_batch, c, s = x_ref.shape
    inv_total = 1.0 / float(n_batch * s)
    w1 = w1_ref[...]
    w2 = w2_ref[...]

    # ---- BN1 statistics over y1 = W1 @ x (summed over batch & spatial) ----
    s1 = jnp.zeros((c, 1), jnp.float32)
    q1 = jnp.zeros((c, 1), jnp.float32)
    for n in range(n_batch):
        y1 = jnp.dot(w1, x_ref[n], preferred_element_type=jnp.float32)
        s1 = s1 + jnp.sum(y1, axis=1, keepdims=True)
        q1 = q1 + jnp.sum(y1 * y1, axis=1, keepdims=True)
    mean1 = s1 * inv_total
    var1 = q1 * inv_total - mean1 * mean1            # biased variance (training BN)
    sc1 = g1_ref[...] * jax.lax.rsqrt(var1 + EPS)
    sh1 = b1_ref[...] - mean1 * sc1
    w1s = w1 * sc1                                   # fold BN1 scale: diag(sc1) @ W1

    # ---- BN2 statistics over y2 = W2 @ relu(BN1(y1)) ----
    s2 = jnp.zeros((c, 1), jnp.float32)
    q2 = jnp.zeros((c, 1), jnp.float32)
    for n in range(n_batch):
        z = jnp.maximum(
            jnp.dot(w1s, x_ref[n], preferred_element_type=jnp.float32) + sh1, 0.0)
        y2 = jnp.dot(w2, z, preferred_element_type=jnp.float32)
        s2 = s2 + jnp.sum(y2, axis=1, keepdims=True)
        q2 = q2 + jnp.sum(y2 * y2, axis=1, keepdims=True)
    mean2 = s2 * inv_total
    var2 = q2 * inv_total - mean2 * mean2
    sc2 = g2_ref[...] * jax.lax.rsqrt(var2 + EPS)
    sh2 = b2_ref[...] - mean2 * sc2
    w2s = w2 * sc2                                   # fold BN2 scale: diag(sc2) @ W2

    # ---- out = BN2(y2) + x (recompute: C*C matmuls are cheap, x stays put) ----
    for n in range(n_batch):
        xn = x_ref[n]
        z = jnp.maximum(
            jnp.dot(w1s, xn, preferred_element_type=jnp.float32) + sh1, 0.0)
        y2 = jnp.dot(w2s, z, preferred_element_type=jnp.float32)
        o_ref[n] = (y2 + sh2 + xn).astype(o_ref.dtype)


def _ru_fused(xs, w1, g1, b1, w2, g2, b2, vmem_limit):
    N, C, S = xs.shape
    f32 = jnp.float32
    vspec = pl.BlockSpec(memory_space=pltpu.MemorySpace.VMEM)  # whole array, no blocking
    ce = pl.CostEstimate(flops=int(10 * C * C * N * S + 12 * C * N * S),
                         transcendentals=0,
                         bytes_accessed=int(2 * N * C * S * 4))
    return pl.pallas_call(
        _fused_kernel,
        in_specs=[vspec] * 7,
        out_specs=vspec,
        out_shape=jax.ShapeDtypeStruct((N, C, S), xs.dtype),
        compiler_params=pltpu.CompilerParams(vmem_limit_bytes=vmem_limit),
        cost_estimate=ce,
    )(xs, w1.astype(f32), w2.astype(f32),
      g1.reshape(C, 1).astype(f32), b1.reshape(C, 1).astype(f32),
      g2.reshape(C, 1).astype(f32), b2.reshape(C, 1).astype(f32))


# ---------------------------------------------------------------------------
# Streaming path: three gridded passes over (batch, spatial tiles).
# ---------------------------------------------------------------------------

def _mask_cols(v, tile_s, s_valid):
    """Zero the zero-padded spatial columns (only built when padding exists)."""
    col = pl.program_id(1) * tile_s + jax.lax.broadcasted_iota(jnp.int32, v.shape, 1)
    return jnp.where(col < s_valid, v, 0.0)


def _stats1_kernel(x_ref, w1_ref, sum_ref, ssq_ref, *, tile_s, s_valid, masked):
    # x_ref: (1, C, tile_s); stats outputs accumulate over the spatial grid axis.
    @pl.when(pl.program_id(1) == 0)
    def _():
        sum_ref[...] = jnp.zeros_like(sum_ref)
        ssq_ref[...] = jnp.zeros_like(ssq_ref)

    y1 = jnp.dot(w1_ref[...], x_ref[0], preferred_element_type=jnp.float32)
    if masked:
        y1 = _mask_cols(y1, tile_s, s_valid)
    sum_ref[...] += jnp.sum(y1, axis=1, keepdims=True)[None]
    ssq_ref[...] += jnp.sum(y1 * y1, axis=1, keepdims=True)[None]


def _stats2_kernel(x_ref, w1s_ref, sh1_ref, w2_ref, sum_ref, ssq_ref, *,
                   tile_s, s_valid, masked):
    @pl.when(pl.program_id(1) == 0)
    def _():
        sum_ref[...] = jnp.zeros_like(sum_ref)
        ssq_ref[...] = jnp.zeros_like(ssq_ref)

    z = jnp.maximum(
        jnp.dot(w1s_ref[...], x_ref[0], preferred_element_type=jnp.float32)
        + sh1_ref[...], 0.0)
    if masked:
        z = _mask_cols(z, tile_s, s_valid)     # padded cols give relu(sh1) != 0
    y2 = jnp.dot(w2_ref[...], z, preferred_element_type=jnp.float32)
    sum_ref[...] += jnp.sum(y2, axis=1, keepdims=True)[None]
    ssq_ref[...] += jnp.sum(y2 * y2, axis=1, keepdims=True)[None]


def _final_kernel(x_ref, w1s_ref, sh1_ref, w2s_ref, sh2_ref, o_ref):
    x = x_ref[0]
    z = jnp.maximum(
        jnp.dot(w1s_ref[...], x, preferred_element_type=jnp.float32) + sh1_ref[...], 0.0)
    y2 = jnp.dot(w2s_ref[...], z, preferred_element_type=jnp.float32)
    o_ref[0] = (y2 + sh2_ref[...] + x).astype(o_ref.dtype)


def _ru_streaming(xs, w1, g1, b1, w2, g2, b2, vmem_limit, tile_s):
    N, C, S = xs.shape
    f32 = jnp.float32
    total = N * S

    tile_s, S_pad = _pick_tile(S, C, vmem_limit, tile_s)
    masked = S_pad != S
    xs_p = jnp.pad(xs, ((0, 0), (0, 0), (0, S_pad - S))) if masked else xs
    gs = S_pad // tile_s
    grid = (N, gs)

    x_spec = pl.BlockSpec((1, C, tile_s), lambda n, s: (n, 0, s))
    w_spec = pl.BlockSpec((C, C), lambda n, s: (0, 0))
    v_spec = pl.BlockSpec((C, 1), lambda n, s: (0, 0))
    stat_spec = pl.BlockSpec((1, C, 1), lambda n, s: (n, 0, 0))  # same block for all s
    stat_shape = jax.ShapeDtypeStruct((N, C, 1), f32)

    # Stats passes accumulate into their (VMEM-resident) output block across the
    # spatial grid axis, so that axis must be "arbitrary"; batch stays "parallel"
    # (megacore sharding on v7x when N >= 2).  The final pass is fully parallel.
    stat_params = pltpu.CompilerParams(
        dimension_semantics=("parallel", "arbitrary"),
        vmem_limit_bytes=vmem_limit)
    final_params = pltpu.CompilerParams(
        dimension_semantics=("parallel", "parallel"),
        vmem_limit_bytes=vmem_limit)

    bytes_x = int(N * C * S_pad * 4)
    flops_mm = int(2 * C * C * N * S_pad)
    ce1 = pl.CostEstimate(flops=flops_mm + 4 * C * N * S_pad, transcendentals=0,
                          bytes_accessed=bytes_x)
    ce2 = pl.CostEstimate(flops=2 * flops_mm + 6 * C * N * S_pad, transcendentals=0,
                          bytes_accessed=bytes_x)
    ce3 = pl.CostEstimate(flops=2 * flops_mm + 4 * C * N * S_pad, transcendentals=0,
                          bytes_accessed=2 * bytes_x)

    def fold_bn(sum_p, ssq_p, gamma, beta):
        # E[y^2] - E[y]^2 in f32; fine for normalized activations, may cancel for
        # extreme populations with |mean| >> std (Welford combine not implemented).
        s = jnp.sum(sum_p[:, :, 0], axis=0)            # (C,)
        q = jnp.sum(ssq_p[:, :, 0], axis=0)            # (C,)
        mean = s / total
        var = q / total - mean * mean                  # biased variance (training BN)
        scale = gamma * jax.lax.rsqrt(var + EPS)
        shift = beta - mean * scale
        return scale.astype(f32), shift.astype(f32)

    # ---- pass 1: stats of y1 = W1 @ x ----
    s1, q1 = pl.pallas_call(
        functools.partial(_stats1_kernel, tile_s=tile_s, s_valid=S, masked=masked),
        grid=grid,
        in_specs=[x_spec, w_spec],
        out_specs=(stat_spec, stat_spec),
        out_shape=(stat_shape, stat_shape),
        compiler_params=stat_params,
        cost_estimate=ce1,
    )(xs_p, w1.astype(f32))
    sc1, sh1 = fold_bn(s1, q1, g1, b1)
    w1s = (sc1[:, None] * w1).astype(f32)              # fold BN1 scale into conv1
    sh1c = sh1.reshape(C, 1)

    # ---- pass 2: stats of y2 = W2 @ relu(BN1(y1))  (y1 recomputed, not spilled) ----
    s2, q2 = pl.pallas_call(
        functools.partial(_stats2_kernel, tile_s=tile_s, s_valid=S, masked=masked),
        grid=grid,
        in_specs=[x_spec, w_spec, v_spec, w_spec],
        out_specs=(stat_spec, stat_spec),
        out_shape=(stat_shape, stat_shape),
        compiler_params=stat_params,
        cost_estimate=ce2,
    )(xs_p, w1s, sh1c, w2.astype(f32))
    sc2, sh2 = fold_bn(s2, q2, g2, b2)
    w2s = (sc2[:, None] * w2).astype(f32)              # fold BN2 scale into conv2
    sh2c = sh2.reshape(C, 1)

    # ---- pass 3: out = BN2(y2) + x ----
    out = pl.pallas_call(
        _final_kernel,
        grid=grid,
        in_specs=[x_spec, w_spec, v_spec, w_spec, v_spec],
        out_specs=x_spec,
        out_shape=jax.ShapeDtypeStruct((N, C, S_pad), xs.dtype),
        compiler_params=final_params,
        cost_estimate=ce3,
    )(xs_p, w1s, sh1c, w2s, sh2c)

    return out[:, :, :S] if masked else out


# ---------------------------------------------------------------------------
# Public wrapper
# ---------------------------------------------------------------------------

def ru_forward(x, w1, g1, b1, w2, g2, b2, *, tile_s=None, force_streaming=False):
    """RU forward.  x: (N, C, D, H, W) f32; w*: (C, C) 1x1x1 Conv3d weights
    (bias=False); g*/b*: (C,) BatchNorm3d affine params (training-mode stats)."""
    N, C, D, H, W = x.shape
    S = D * H * W
    xs = x.reshape(N, C, S)                   # free reshape, keeps NCDHW order
    vmem_limit = _vmem_limit_bytes()

    x_bytes = N * C * S * x.dtype.itemsize
    small_bytes = 2 * C * C * 4 + 8 * C * 4
    # Fast path when input + output activation (single-buffered: no blocking)
    # plus slack fits comfortably under the generation-aware VMEM limit.
    use_fused = (not force_streaming) and (
        2 * x_bytes + small_bytes + (2 << 20) <= int(0.6 * vmem_limit))

    if use_fused:
        out = _ru_fused(xs, w1, g1, b1, w2, g2, b2, vmem_limit)
    else:
        out = _ru_streaming(xs, w1, g1, b1, w2, g2, b2, vmem_limit, tile_s)

    # TODO(synk): BatchNorm3d running_mean/running_var buffer updates are stateful
    # training bookkeeping and not part of the forward output, so not emitted.
    return out.reshape(N, C, D, H, W)


# ---------------------------------------------------------------------------
# Pure-JAX reference (training-mode BatchNorm3d semantics) for correctness.
# ---------------------------------------------------------------------------

def ru_reference(x, w1, g1, b1, w2, g2, b2):
    def conv1x1(v, w):
        return jnp.einsum('oc,ncdhw->nodhw', w, v)

    def bn(v, g, b):
        mu = jnp.mean(v, axis=(0, 2, 3, 4), keepdims=True)
        var = jnp.mean((v - mu) ** 2, axis=(0, 2, 3, 4), keepdims=True)
        return ((v - mu) * jax.lax.rsqrt(var + EPS) * g.reshape(1, -1, 1, 1, 1)
                + b.reshape(1, -1, 1, 1, 1))

    y1 = jnp.maximum(bn(conv1x1(x, w1), g1, b1), 0.0)
    y2 = bn(conv1x1(y1, w2), g2, b2)
    return y2 + x


if __name__ == "__main__":
    key = jax.random.PRNGKey(0)
    k_x, k_w1, k_w2, k_g1, k_b1, k_g2, k_b2, k_x2 = jax.random.split(key, 8)

    N, C, D, H, W = 2, 8, 4, 8, 8             # S = 256
    x = jax.random.normal(k_x, (N, C, D, H, W), dtype=jnp.float32)

    # 1x1x1 Conv3d weights (out_ch, in_ch, 1, 1, 1) stored as (out_ch, in_ch), bias=False.
    w1 = jax.random.normal(k_w1, (C, C), dtype=jnp.float32) / jnp.sqrt(C)
    w2 = jax.random.normal(k_w2, (C, C), dtype=jnp.float32) / jnp.sqrt(C)
    # BatchNorm3d affine params (non-trivial values to exercise the folded scale/shift).
    g1 = 1.0 + 0.1 * jax.random.normal(k_g1, (C,), dtype=jnp.float32)
    b1 = 0.1 * jax.random.normal(k_b1, (C,), dtype=jnp.float32)
    g2 = 1.0 + 0.1 * jax.random.normal(k_g2, (C,), dtype=jnp.float32)
    b2 = 0.1 * jax.random.normal(k_b2, (C,), dtype=jnp.float32)

    ref = jax.block_until_ready(ru_reference(x, w1, g1, b1, w2, g2, b2))

    # 1) fused VMEM-resident fast path (default for activations this small).
    out_fused = jax.block_until_ready(jax.jit(ru_forward)(x, w1, g1, b1, w2, g2, b2))
    assert out_fused.shape == x.shape and out_fused.dtype == x.dtype
    assert jnp.allclose(out_fused, ref, atol=1e-3, rtol=1e-3), (
        "fused mismatch, max abs diff = %s" % jnp.max(jnp.abs(out_fused - ref)))

    # 2) streaming three-pass path (forced; tile_s=128 -> grid (2, 2)).
    run_stream = jax.jit(functools.partial(ru_forward, force_streaming=True, tile_s=128))
    out_stream = jax.block_until_ready(run_stream(x, w1, g1, b1, w2, g2, b2))
    assert jnp.allclose(out_stream, ref, atol=1e-3, rtol=1e-3), (
        "streaming mismatch, max abs diff = %s" % jnp.max(jnp.abs(out_stream - ref)))

    # 3) streaming path with S not a multiple of 128 (exercises padded/masked tail).
    N2, D2, H2, W2 = 1, 3, 5, 7               # S = 105 -> padded to 128
    x2 = jax.random.normal(k_x2, (N2, C, D2, H2, W2), dtype=jnp.float32)
    ref2 = jax.block_until_ready(ru_reference(x2, w1, g1, b1, w2, g2, b2))
    out_masked = jax.block_until_ready(run_stream(x2, w1, g1, b1, w2, g2, b2))
    assert jnp.allclose(out_masked, ref2, atol=1e-3, rtol=1e-3), (
        "masked mismatch, max abs diff = %s" % jnp.max(jnp.abs(out_masked - ref2)))

    print("KERNEL_OK")
</pallas_src>

<mosaic_0001>
module attributes {stable_mosaic.version = 11 : i64} {
  func.func @_fused_kernel(%arg0: memref<2x8x256xf32, #tpu.memory_space<vmem>>, %arg1: memref<8x8xf32, #tpu.memory_space<vmem>>, %arg2: memref<8x8xf32, #tpu.memory_space<vmem>>, %arg3: memref<8x1xf32, #tpu.memory_space<vmem>>, %arg4: memref<8x1xf32, #tpu.memory_space<vmem>>, %arg5: memref<8x1xf32, #tpu.memory_space<vmem>>, %arg6: memref<8x1xf32, #tpu.memory_space<vmem>>, %arg7: memref<2x8x256xf32, #tpu.memory_space<vmem>>) attributes {dimension_semantics = [], scalar_prefetch = 0 : i64, scratch_operands = 0 : i64, tpu.core_type = #tpu.core_type<tc>} {
    %c0 = arith.constant 0 : index
    %c0_0 = arith.constant 0 : index
    %0 = vector.load %arg1[%c0, %c0_0] : memref<8x8xf32, #tpu.memory_space<vmem>>, vector<8x8xf32>
    %c0_1 = arith.constant 0 : index
    %c0_2 = arith.constant 0 : index
    %1 = vector.load %arg2[%c0_1, %c0_2] : memref<8x8xf32, #tpu.memory_space<vmem>>, vector<8x8xf32>
    %cst = arith.constant 0.000000e+00 : f32
    %2 = vector.broadcast %cst : f32 to vector<8x1xf32>
    %cst_3 = arith.constant 0.000000e+00 : f32
    %3 = vector.broadcast %cst_3 : f32 to vector<8x1xf32>
    %c0_4 = arith.constant 0 : index
    %c0_5 = arith.constant 0 : index
    %c0_6 = arith.constant 0 : index
    %4 = vector.load %arg0[%c0_4, %c0_5, %c0_6] : memref<2x8x256xf32, #tpu.memory_space<vmem>>, vector<1x8x256xf32>
    %5 = vector.shape_cast %4 : vector<1x8x256xf32> to vector<8x256xf32>
    %cst_7 = arith.constant dense<0.000000e+00> : vector<8x256xf32>
    %6 = tpu.matmul %0, %5, %cst_7 {dimension_numbers = #tpu.dot_dimension_numbers<[1], [0], [0], [1], [0, 0, 1, 1], [], []>} : vector<8x8xf32>, vector<8x256xf32>, vector<8x256xf32> -> vector<8x256xf32>
    %cst_8 = arith.constant dense<0.000000e+00> : vector<8xf32>
    %7 = vector.multi_reduction <add>, %6, %cst_8 [1] : vector<8x256xf32> to vector<8xf32>
    %8 = vector.shape_cast %7 : vector<8xf32> to vector<8x1xf32>
    %9 = arith.addf %2, %8 : vector<8x1xf32>
    %10 = arith.mulf %6, %6 : vector<8x256xf32>
    %cst_9 = arith.constant dense<0.000000e+00> : vector<8xf32>
    %11 = vector.multi_reduction <add>, %10, %cst_9 [1] : vector<8x256xf32> to vector<8xf32>
    %12 = vector.shape_cast %11 : vector<8xf32> to vector<8x1xf32>
    %13 = arith.addf %3, %12 : vector<8x1xf32>
    %c1 = arith.constant 1 : index
    %c0_10 = arith.constant 0 : index
    %c0_11 = arith.constant 0 : index
    %14 = vector.load %arg0[%c1, %c0_10, %c0_11] : memref<2x8x256xf32, #tpu.memory_space<vmem>>, vector<1x8x256xf32>
    %15 = vector.shape_cast %14 : vector<1x8x256xf32> to vector<8x256xf32>
    %cst_12 = arith.constant dense<0.000000e+00> : vector<8x256xf32>
    %16 = tpu.matmul %0, %15, %cst_12 {dimension_numbers = #tpu.dot_dimension_numbers<[1], [0], [0], [1], [0, 0, 1, 1], [], []>} : vector<8x8xf32>, vector<8x256xf32>, vector<8x256xf32> -> vector<8x256xf32>
    %cst_13 = arith.constant dense<0.000000e+00> : vector<8xf32>
    %17 = vector.multi_reduction <add>, %16, %cst_13 [1] : vector<8x256xf32> to vector<8xf32>
    %18 = vector.shape_cast %17 : vector<8xf32> to vector<8x1xf32>
    %19 = arith.addf %9, %18 : vector<8x1xf32>
    %20 = arith.mulf %16, %16 : vector<8x256xf32>
    %cst_14 = arith.constant dense<0.000000e+00> : vector<8xf32>
    %21 = vector.multi_reduction <add>, %20, %cst_14 [1] : vector<8x256xf32> to vector<8xf32>
    %22 = vector.shape_cast %21 : vector<8xf32> to vector<8x1xf32>
    %23 = arith.addf %13, %22 : vector<8x1xf32>
    %cst_15 = arith.constant 0.001953125 : f32
    %24 = vector.broadcast %cst_15 : f32 to vector<8x1xf32>
    %25 = arith.mulf %19, %24 : vector<8x1xf32>
    %cst_16 = arith.constant 0.001953125 : f32
    %26 = vector.broadcast %cst_16 : f32 to vector<8x1xf32>
    %27 = arith.mulf %23, %26 : vector<8x1xf32>
    %28 = arith.mulf %25, %25 : vector<8x1xf32>
    %29 = arith.subf %27, %28 : vector<8x1xf32>
    %c0_17 = arith.constant 0 : index
    %c0_18 = arith.constant 0 : index
    %30 = vector.load %arg3[%c0_17, %c0_18] : memref<8x1xf32, #tpu.memory_space<vmem>>, vector<8x1xf32>
    %cst_19 = arith.constant 9.99999974E-6 : f32
    %31 = vector.broadcast %cst_19 : f32 to vector<8x1xf32>
    %32 = arith.addf %29, %31 : vector<8x1xf32>
    %33 = math.rsqrt %32 : vector<8x1xf32>
    %34 = arith.mulf %30, %33 : vector<8x1xf32>
    %c0_20 = arith.constant 0 : index
    %c0_21 = arith.constant 0 : index
    %35 = vector.load %arg4[%c0_20, %c0_21] : memref<8x1xf32, #tpu.memory_space<vmem>>, vector<8x1xf32>
    %36 = arith.mulf %25, %34 : vector<8x1xf32>
    %37 = arith.subf %35, %36 : vector<8x1xf32>
    %38 = vector.broadcast %34 : vector<8x1xf32> to vector<8x8xf32>
    %39 = arith.mulf %0, %38 : vector<8x8xf32>
    %cst_22 = arith.constant 0.000000e+00 : f32
    %40 = vector.broadcast %cst_22 : f32 to vector<8x1xf32>
    %cst_23 = arith.constant 0.000000e+00 : f32
    %41 = vector.broadcast %cst_23 : f32 to vector<8x1xf32>
    %c0_24 = arith.constant 0 : index
    %c0_25 = arith.constant 0 : index
    %c0_26 = arith.constant 0 : index
    %42 = vector.load %arg0[%c0_24, %c0_25, %c0_26] : memref<2x8x256xf32, #tpu.memory_space<vmem>>, vector<1x8x256xf32>
    %43 = vector.shape_cast %42 : vector<1x8x256xf32> to vector<8x256xf32>
    %cst_27 = arith.constant dense<0.000000e+00> : vector<8x256xf32>
    %44 = tpu.matmul %39, %43, %cst_27 {dimension_numbers = #tpu.dot_dimension_numbers<[1], [0], [0], [1], [0, 0, 1, 1], [], []>} : vector<8x8xf32>, vector<8x256xf32>, vector<8x256xf32> -> vector<8x256xf32>
    %45 = vector.broadcast %37 : vector<8x1xf32> to vector<8x256xf32>
    %46 = arith.addf %44, %45 : vector<8x256xf32>
    %cst_28 = arith.constant 0.000000e+00 : f32
    %47 = vector.broadcast %cst_28 : f32 to vector<8x256xf32>
    %48 = arith.maximumf %46, %47 : vector<8x256xf32>
    %cst_29 = arith.constant dense<0.000000e+00> : vector<8x256xf32>
    %49 = tpu.matmul %1, %48, %cst_29 {dimension_numbers = #tpu.dot_dimension_numbers<[1], [0], [0], [1], [0, 0, 1, 1], [], []>} : vector<8x8xf32>, vector<8x256xf32>, vector<8x256xf32> -> vector<8x256xf32>
    %cst_30 = arith.constant dense<0.000000e+00> : vector<8xf32>
    %50 = vector.multi_reduction <add>, %49, %cst_30 [1] : vector<8x256xf32> to vector<8xf32>
    %51 = vector.shape_cast %50 : vector<8xf32> to vector<8x1xf32>
    %52 = arith.addf %40, %51 : vector<8x1xf32>
    %53 = arith.mulf %49, %49 : vector<8x256xf32>
    %cst_31 = arith.constant dense<0.000000e+00> : vector<8xf32>
    %54 = vector.multi_reduction <add>, %53, %cst_31 [1] : vector<8x256xf32> to vector<8xf32>
    %55 = vector.shape_cast %54 : vector<8xf32> to vector<8x1xf32>
    %56 = arith.addf %41, %55 : vector<8x1xf32>
    %c1_32 = arith.constant 1 : index
    %c0_33 = arith.constant 0 : index
    %c0_34 = arith.constant 0 : index
    %57 = vector.load %arg0[%c1_32, %c0_33, %c0_34] : memref<2x8x256xf32, #tpu.memory_space<vmem>>, vector<1x8x256xf32>
    %58 = vector.shape_cast %57 : vector<1x8x256xf32> to vector<8x256xf32>
    %cst_35 = arith.constant dense<0.000000e+00> : vector<8x256xf32>
    %59 = tpu.matmul %39, %58, %cst_35 {dimension_numbers = #tpu.dot_dimension_numbers<[1], [0], [0], [1], [0, 0, 1, 1], [], []>} : vector<8x8xf32>, vector<8x256xf32>, vector<8x256xf32> -> vector<8x256xf32>
    %60 = vector.broadcast %37 : vector<8x1xf32> to vector<8x256xf32>
    %61 = arith.addf %59, %60 : vector<8x256xf32>
    %cst_36 = arith.constant 0.000000e+00 : f32
    %62 = vector.broadcast %cst_36 : f32 to vector<8x256xf32>
    %63 = arith.maximumf %61, %62 : vector<8x256xf32>
    %cst_37 = arith.constant dense<0.000000e+00> : vector<8x256xf32>
    %64 = tpu.matmul %1, %63, %cst_37 {dimension_numbers = #tpu.dot_dimension_numbers<[1], [0], [0], [1], [0, 0, 1, 1], [], []>} : vector<8x8xf32>, vector<8x256xf32>, vector<8x256xf32> -> vector<8x256xf32>
    %cst_38 = arith.constant dense<0.000000e+00> : vector<8xf32>
    %65 = vector.multi_reduction <add>, %64, %cst_38 [1] : vector<8x256xf32> to vector<8xf32>
    %66 = vector.shape_cast %65 : vector<8xf32> to vector<8x1xf32>
    %67 = arith.addf %52, %66 : vector<8x1xf32>
    %68 = arith.mulf %64, %64 : vector<8x256xf32>
    %cst_39 = arith.constant dense<0.000000e+00> : vector<8xf32>
    %69 = vector.multi_reduction <add>, %68, %cst_39 [1] : vector<8x256xf32> to vector<8xf32>
    %70 = vector.shape_cast %69 : vector<8xf32> to vector<8x1xf32>
    %71 = arith.addf %56, %70 : vector<8x1xf32>
    %cst_40 = arith.constant 0.001953125 : f32
    %72 = vector.broadcast %cst_40 : f32 to vector<8x1xf32>
    %73 = arith.mulf %67, %72 : vector<8x1xf32>
    %cst_41 = arith.constant 0.001953125 : f32
    %74 = vector.broadcast %cst_41 : f32 to vector<8x1xf32>
    %75 = arith.mulf %71, %74 : vector<8x1xf32>
    %76 = arith.mulf %73, %73 : vector<8x1xf32>
    %77 = arith.subf %75, %76 : vector<8x1xf32>
    %c0_42 = arith.constant 0 : index
    %c0_43 = arith.constant 0 : index
    %78 = vector.load %arg5[%c0_42, %c0_43] : memref<8x1xf32, #tpu.memory_space<vmem>>, vector<8x1xf32>
    %cst_44 = arith.constant 9.99999974E-6 : f32
    %79 = vector.broadcast %cst_44 : f32 to vector<8x1xf32>
    %80 = arith.addf %77, %79 : vector<8x1xf32>
    %81 = math.rsqrt %80 : vector<8x1xf32>
    %82 = arith.mulf %78, %81 : vector<8x1xf32>
    %c0_45 = arith.constant 0 : index
    %c0_46 = arith.constant 0 : index
    %83 = vector.load %arg6[%c0_45, %c0_46] : memref<8x1xf32, #tpu.memory_space<vmem>>, vector<8x1xf32>
    %84 = arith.mulf %73, %82 : vector<8x1xf32>
    %85 = arith.subf %83, %84 : vector<8x1xf32>
    %86 = vector.broadcast %82 : vector<8x1xf32> to vector<8x8xf32>
    %87 = arith.mulf %1, %86 : vector<8x8xf32>
    %c0_47 = arith.constant 0 : index
    %c0_48 = arith.constant 0 : index
    %c0_49 = arith.constant 0 : index
    %88 = vector.load %arg0[%c0_47, %c0_48, %c0_49] : memref<2x8x256xf32, #tpu.memory_space<vmem>>, vector<1x8x256xf32>
    %89 = vector.shape_cast %88 : vector<1x8x256xf32> to vector<8x256xf32>
    %cst_50 = arith.constant dense<0.000000e+00> : vector<8x256xf32>
    %90 = tpu.matmul %39, %89, %cst_50 {dimension_numbers = #tpu.dot_dimension_numbers<[1], [0], [0], [1], [0, 0, 1, 1], [], []>} : vector<8x8xf32>, vector<8x256xf32>, vector<8x256xf32> -> vector<8x256xf32>
    %91 = vector.broadcast %37 : vector<8x1xf32> to vector<8x256xf32>
    %92 = arith.addf %90, %91 : vector<8x256xf32>
    %cst_51 = arith.constant 0.000000e+00 : f32
    %93 = vector.broadcast %cst_51 : f32 to vector<8x256xf32>
    %94 = arith.maximumf %92, %93 : vector<8x256xf32>
    %cst_52 = arith.constant dense<0.000000e+00> : vector<8x256xf32>
    %95 = tpu.matmul %87, %94, %cst_52 {dimension_numbers = #tpu.dot_dimension_numbers<[1], [0], [0], [1], [0, 0, 1, 1], [], []>} : vector<8x8xf32>, vector<8x256xf32>, vector<8x256xf32> -> vector<8x256xf32>
    %96 = vector.broadcast %85 : vector<8x1xf32> to vector<8x256xf32>
    %97 = arith.addf %95, %96 : vector<8x256xf32>
    %98 = arith.addf %97, %89 : vector<8x256xf32>
    %c0_53 = arith.constant 0 : index
    %c0_54 = arith.constant 0 : index
    %c0_55 = arith.constant 0 : index
    %99 = vector.load %arg7[%c0_53, %c0_54, %c0_55] : memref<2x8x256xf32, #tpu.memory_space<vmem>>, vector<1x8x256xf32>
    %100 = vector.shape_cast %99 : vector<1x8x256xf32> to vector<8x256xf32>
    %101 = vector.shape_cast %98 : vector<8x256xf32> to vector<1x8x256xf32>
    tpu.vector_store %arg7[%c0_53, %c0_54, %c0_55], %101 {strides = array<i32>} : memref<2x8x256xf32, #tpu.memory_space<vmem>>, vector<1x8x256xf32>,
    %c1_56 = arith.constant 1 : index
    %c0_57 = arith.constant 0 : index
    %c0_58 = arith.constant 0 : index
    %102 = vector.load %arg0[%c1_56, %c0_57, %c0_58] : memref<2x8x256xf32, #tpu.memory_space<vmem>>, vector<1x8x256xf32>
    %103 = vector.shape_cast %102 : vector<1x8x256xf32> to vector<8x256xf32>
    %cst_59 = arith.constant dense<0.000000e+00> : vector<8x256xf32>
    %104 = tpu.matmul %39, %103, %cst_59 {dimension_numbers = #tpu.dot_dimension_numbers<[1], [0], [0], [1], [0, 0, 1, 1], [], []>} : vector<8x8xf32>, vector<8x256xf32>, vector<8x256xf32> -> vector<8x256xf32>
    %105 = vector.broadcast %37 : vector<8x1xf32> to vector<8x256xf32>
    %106 = arith.addf %104, %105 : vector<8x256xf32>
    %cst_60 = arith.constant 0.000000e+00 : f32
    %107 = vector.broadcast %cst_60 : f32 to vector<8x256xf32>
    %108 = arith.maximumf %106, %107 : vector<8x256xf32>
    %cst_61 = arith.constant dense<0.000000e+00> : vector<8x256xf32>
    %109 = tpu.matmul %87, %108, %cst_61 {dimension_numbers = #tpu.dot_dimension_numbers<[1], [0], [0], [1], [0, 0, 1, 1], [], []>} : vector<8x8xf32>, vector<8x256xf32>, vector<8x256xf32> -> vector<8x256xf32>
    %110 = vector.broadcast %85 : vector<8x1xf32> to vector<8x256xf32>
    %111 = arith.addf %109, %110 : vector<8x256xf32>
    %112 = arith.addf %111, %103 : vector<8x256xf32>
    %c1_62 = arith.constant 1 : index
    %c0_63 = arith.constant 0 : index
    %c0_64 = arith.constant 0 : index
    %113 = vector.load %arg7[%c1_62, %c0_63, %c0_64] : memref<2x8x256xf32, #tpu.memory_space<vmem>>, vector<1x8x256xf32>
    %114 = vector.shape_cast %113 : vector<1x8x256xf32> to vector<8x256xf32>
    %115 = vector.shape_cast %112 : vector<8x256xf32> to vector<1x8x256xf32>
    tpu.vector_store %arg7[%c1_62, %c0_63, %c0_64], %115 {strides = array<i32>} : memref<2x8x256xf32, #tpu.memory_space<vmem>>, vector<1x8x256xf32>,
    return
  }
}

</mosaic_0001>

<llo_original>
// kernel: ru_forward.1
$region0: #{ru_forward.1}
  #allocation0 [shape = 'u32[]', space=smem, size = 0x4, offset = 0x4, fixed_abs, tag = 'smem constant byte address 0x4 - core index']
  #allocation1 [shape = 'u32[144,128]{1,0:T(1,128)}', space=vmem, size = 0x12000, scoped, tag = 'internal scratch']
  %s0 = inlined_call_operand.vmem [shape: f32[2,8,256], index: 0, kind: input, shape index: {}]
  %s1 = inlined_call_operand.vmem [shape: f32[8,8], index: 1, kind: input, shape index: {}]
  %s2 = inlined_call_operand.vmem [shape: f32[8,8], index: 2, kind: input, shape index: {}]
  %s3 = inlined_call_operand.vmem [shape: f32[8,1], index: 3, kind: input, shape index: {}]
  %s4 = inlined_call_operand.vmem [shape: f32[8,1], index: 4, kind: input, shape index: {}]
  %s5 = inlined_call_operand.vmem [shape: f32[8,1], index: 5, kind: input, shape index: {}]
  %s6 = inlined_call_operand.vmem [shape: f32[8,1], index: 6, kind: input, shape index: {}]
  %s7 = inlined_call_operand.vmem [shape: f32[2,8,256], index: 7, kind: output, shape index: {}]
  %s8 = sld [smem:[#allocation0]]
  $region38: #{ru_forward.1} parent=0
    _
  %s10 = ssub.s32 1, %s8
  %s11 = scalar_select 0, %s10, %s8
  // Predicated region
  $region2: #{ru_forward.1} parent=0 // pred_check
    _
  $region3: #{ru_forward.1} parent=0 // pred_check_branch
    %13 = sbr.rel (0) target = $region5
  $region4: #{ru_forward.1} parent=0 // pred_region
    _
  $region5: #{ru_forward.1} parent=0 // pred_fallthru
    _
  // Predicated region
  $region6: #{ru_forward.1} parent=0 // pred_check
    _
  $region7: #{ru_forward.1} parent=0 // pred_check_branch
    %15 = sbr.rel (0) target = $region9
  $region8: #{ru_forward.1} parent=0 // pred_region
    _
  $region9: #{ru_forward.1} parent=0 // pred_fallthru
    _
  // Predicated region
  $region10: #{ru_forward.1} parent=0 // pred_check
    _
  $region11: #{ru_forward.1} parent=0 // pred_check_branch
    %17 = sbr.rel (0) target = $region13
  $region12: #{ru_forward.1} parent=0 // pred_region
    _
  $region13: #{ru_forward.1} parent=0 // pred_fallthru
    _
  // Predicated region
  $region14: #{ru_forward.1} parent=0 // pred_check
    _
  $region15: #{ru_forward.1} parent=0 // pred_check_branch
    %19 = sbr.rel (0) target = $region17
  $region16: #{ru_forward.1} parent=0 // pred_region
    _
  $region17: #{ru_forward.1} parent=0 // pred_fallthru
    _
  // Predicated region
  $region18: #{ru_forward.1} parent=0 // pred_check
    _
  $region19: #{ru_forward.1} parent=0 // pred_check_branch
    %21 = sbr.rel (0) target = $region21
  $region20: #{ru_forward.1} parent=0 // pred_region
    _
  $region21: #{ru_forward.1} parent=0 // pred_fallthru
    _
  // Predicated region
  $region22: #{ru_forward.1} parent=0 // pred_check
    _
  $region23: #{ru_forward.1} parent=0 // pred_check_branch
    %23 = sbr.rel (0) target = $region25
  $region24: #{ru_forward.1} parent=0 // pred_region
    _
  $region25: #{ru_forward.1} parent=0 // pred_fallthru
    _
  // Predicated region
  $region26: #{ru_forward.1} parent=0 // pred_check
    _
  $region27: #{ru_forward.1} parent=0 // pred_check_branch
    %25 = sbr.rel (0) target = $region29
  $region28: #{ru_forward.1} parent=0 // pred_region
    _
  $region29: #{ru_forward.1} parent=0 // pred_fallthru
    _
  %v26 = vld [vmem:[%s1] sm:$0xff]
  %v27 = vld [vmem:[%s2] sm:$0xff]
  %v28 = vld [vmem:[%s0] sm:$0xff]
  %v29 = vld [vmem:[%s0 + $0x8] sm:$0xff]
  %vm30 = vcmask 64512
  %v32 = vsel %vm30, %v26, 0
  %34 = vmatprep.subr.mxu0 %v29
  %35 = vmatpush1.msra.mxu0 %v28
  %36 = vmatprep.subr.mxu0 0.0
  %37 = vmatpush1.msra.mxu0 0.0
  %38 = vmatprep.subr.mxu0 0.0
  %39 = vmatpush1.msra.mxu0 0.0
  %40 = vmatprep.subr.mxu0 0.0
  %41 = vmatpush1.msra.mxu0 0.0
  %42 = vmatprep.subr.mxu0 0.0
  %43 = vmatpush1.msra.mxu0 0.0
  %44 = vmatprep.subr.mxu0 0.0
  %45 = vmatpush1.msra.mxu0 0.0
  %46 = vmatprep.subr.mxu0 0.0
  %47 = vmatpush1.msra.mxu0 0.0
  %48 = vmatprep.subr.mxu0 0.0
  %49 = vmatpush1.msra.mxu0 0.0
  %50 = vmatprep.subr.mxu0 0.0
  %51 = vmatpush1.msra.mxu0 0.0
  %52 = vmatprep.subr.mxu0 0.0
  %53 = vmatpush1.msra.mxu0 0.0
  %54 = vmatprep.subr.mxu0 0.0
  %55 = vmatpush1.msra.mxu0 0.0
  %56 = vmatprep.subr.mxu0 0.0
  %57 = vmatpush1.msra.mxu0 0.0
  %58 = vmatprep.subr.mxu0 0.0
  %59 = vmatpush1.msra.mxu0 0.0
  %60 = vmatprep.subr.mxu0 0.0
  %61 = vmatpush1.msra.mxu0 0.0
  %62 = vmatprep.subr.mxu0 0.0
  %63 = vmatpush1.msra.mxu0 0.0
  %64 = vmatprep.subr.mxu0 0.0
  %65 = vmatpush1.msra.mxu0 0.0
  %66 = vmatprep.subr.mxu0 0.0
  %67 = vmatpush1.msra.mxu0 0.0
  %68 = vmatprep.subr.mxu0 0.0
  %69 = vmatpush1.msra.mxu0 0.0
  %70 = vmatprep.subr.mxu0 0.0
  %71 = vmatpush1.msra.mxu0 0.0
  %72 = vmatprep.subr.mxu0 0.0
  %73 = vmatpush1.msra.mxu0 0.0
  %74 = vmatprep.subr.mxu0 0.0
  %75 = vmatpush1.msra.mxu0 0.0
  %76 = vmatprep.subr.mxu0 0.0
  %77 = vmatpush1.msra.mxu0 0.0
  %78 = vmatprep.subr.mxu0 0.0
  %79 = vmatpush1.msra.mxu0 0.0
  %80 = vmatprep.subr.mxu0 0.0
  %81 = vmatpush1.msra.mxu0 0.0
  %82 = vmatprep.subr.mxu0 0.0
  %83 = vmatpush1.msra.mxu0 0.0
  %84 = vmatprep.subr.mxu0 0.0
  %85 = vmatpush1.msra.mxu0 0.0
  %86 = vmatprep.subr.mxu0 0.0
  %87 = vmatpush1.msra.mxu0 0.0
  %88 = vmatprep.subr.mxu0 0.0
  %89 = vmatpush1.msra.mxu0 0.0
  %90 = vmatprep.subr.mxu0 0.0
  %91 = vmatpush1.msra.mxu0 0.0
  %92 = vmatprep.subr.mxu0 0.0
  %93 = vmatpush1.msra.mxu0 0.0
  %94 = vmatprep.subr.mxu0 0.0
  %95 = vmatpush1.msra.mxu0 0.0
  %96 = vmatprep.subr.mxu0 0.0
  %97 = vmatpush1.msra.mxu0 0.0
  %98 = vmatprep.mubr.f32.mxu0 0.0
  %99 = vmatmul.mubr.f32.gmra.mrb[0].mxu0 %v32
  %v100 = vpop.f32.mrb[0].mxu0
  %v101 = vadd.f32 0.0, %v100
  %v102 = vpop.f32.mrb[0].mxu0
  %v103 = vadd.f32 0.0, %v102
  %104 = vdwg.mxu0
  %v105 = vadd.f32 %v101, %v103
  %106 = vadd.xlane.f32.xlu0 %v105
  %v107 = vpop.xlane.xlu0 %106
  %v108 = vadd.f32 %v107, 0.0
  %v109 = vmul.f32 %v101, %v101
  %v110 = vmul.f32 %v103, %v103
  %v111 = vadd.f32 %v109, %v110
  %112 = vadd.xlane.f32.xlu0 %v111
  %v113 = vpop.xlane.xlu0 %112
  %v114 = vadd.f32 %v113, 0.0
  %s115 = scalar_lea.vmem %s0, 16
  %v116 = vld [vmem:[%s115] sm:$0xff]
  %v117 = vld [vmem:[%s115 + $0x8] sm:$0xff]
  %118 = vmatprep.subr.mxu0 %v117
  %119 = vmatpush1.msra.mxu0 %v116
  %120 = vmatprep.subr.mxu0 0.0
  %121 = vmatpush1.msra.mxu0 0.0
  %122 = vmatprep.subr.mxu0 0.0
  %123 = vmatpush1.msra.mxu0 0.0
  %124 = vmatprep.subr.mxu0 0.0
  %125 = vmatpush1.msra.mxu0 0.0
  %126 = vmatprep.subr.mxu0 0.0
  %127 = vmatpush1.msra.mxu0 0.0
  %128 = vmatprep.subr.mxu0 0.0
  %129 = vmatpush1.msra.mxu0 0.0
  %130 = vmatprep.subr.mxu0 0.0
  %131 = vmatpush1.msra.mxu0 0.0
  %132 = vmatprep.subr.mxu0 0.0
  %133 = vmatpush1.msra.mxu0 0.0
  %134 = vmatprep.subr.mxu0 0.0
  %135 = vmatpush1.msra.mxu0 0.0
  %136 = vmatprep.subr.mxu0 0.0
  %137 = vmatpush1.msra.mxu0 0.0
  %138 = vmatprep.subr.mxu0 0.0
  %139 = vmatpush1.msra.mxu0 0.0
  %140 = vmatprep.subr.mxu0 0.0
  %141 = vmatpush1.msra.mxu0 0.0
  %142 = vmatprep.subr.mxu0 0.0
  %143 = vmatpush1.msra.mxu0 0.0
  %144 = vmatprep.subr.mxu0 0.0
  %145 = vmatpush1.msra.mxu0 0.0
  %146 = vmatprep.subr.mxu0 0.0
  %147 = vmatpush1.msra.mxu0 0.0
  %148 = vmatprep.subr.mxu0 0.0
  %149 = vmatpush1.msra.mxu0 0.0
  %150 = vmatprep.subr.mxu0 0.0
  %151 = vmatpush1.msra.mxu0 0.0
  %152 = vmatprep.subr.mxu0 0.0
  %153 = vmatpush1.msra.mxu0 0.0
  %154 = vmatprep.subr.mxu0 0.0
  %155 = vmatpush1.msra.mxu0 0.0
  %156 = vmatprep.subr.mxu0 0.0
  %157 = vmatpush1.msra.mxu0 0.0
  %158 = vmatprep.subr.mxu0 0.0
  %159 = vmatpush1.msra.mxu0 0.0
  %160 = vmatprep.subr.mxu0 0.0
  %161 = vmatpush1.msra.mxu0 0.0
  %162 = vmatprep.subr.mxu0 0.0
  %163 = vmatpush1.msra.mxu0 0.0
  %164 = vmatprep.subr.mxu0 0.0
  %165 = vmatpush1.msra.mxu0 0.0
  %166 = vmatprep.subr.mxu0 0.0
  %167 = vmatpush1.msra.mxu0 0.0
  %168 = vmatprep.subr.mxu0 0.0
  %169 = vmatpush1.msra.mxu0 0.0
  %170 = vmatprep.subr.mxu0 0.0
  %171 = vmatpush1.msra.mxu0 0.0
  %172 = vmatprep.subr.mxu0 0.0
  %173 = vmatpush1.msra.mxu0 0.0
  %174 = vmatprep.subr.mxu0 0.0
  %175 = vmatpush1.msra.mxu0 0.0
  %176 = vmatprep.subr.mxu0 0.0
  %177 = vmatpush1.msra.mxu0 0.0
  %178 = vmatprep.subr.mxu0 0.0
  %179 = vmatpush1.msra.mxu0 0.0
  %180 = vmatprep.subr.mxu0 0.0
  %181 = vmatpush1.msra.mxu0 0.0
  %182 = vmatprep.mubr.f32.mxu0 0.0
  %183 = vmatmul.mubr.f32.gmra.mrb[0].mxu0 %v32
  %v184 = vpop.f32.mrb[0].mxu0
  %v185 = vadd.f32 0.0, %v184
  %v186 = vpop.f32.mrb[0].mxu0
  %v187 = vadd.f32 0.0, %v186
  %188 = vdwg.mxu0
  %v189 = vadd.f32 %v185, %v187
  %190 = vadd.xlane.f32.xlu0 %v189
  %v191 = vpop.xlane.xlu0 %190
  %v192 = vadd.f32 %v108, %v191
  %v193 = vmul.f32 %v185, %v185
  %v194 = vmul.f32 %v187, %v187
  %v195 = vadd.f32 %v193, %v194
  %196 = vadd.xlane.f32.xlu0 %v195
  %v197 = vpop.xlane.xlu0 %196
  %v198 = vadd.f32 %v114, %v197
  %v199 = vmul.f32 %v192, 0.001953125
  %v200 = vmul.f32 %v198, 0.001953125
  %v201 = vmul.f32 %v199, %v199
  %v202 = vsub.f32 %v200, %v201
  %v203 = vld [vmem:[%s3] sm:$0xff]
  %v204 = vadd.f32 %v202, 1e-05
  %v205 = vrsqrt.pop %v204
  %v206 = vmul.f32 %v203, %v205
  %v207 = vld [vmem:[%s4] sm:$0xff]
  %v208 = vmul.f32 %v199, %v206
  %v209 = vsub.f32 %v207, %v208
  %211 = vset.pattern.permute.xlu0 0
  %212 = vperm.xlu0 %211, %v206
  %v213 = vpop.permute.xlu0 %212
  %v215 = vmul.f32 %v26, %v213
  %217 = vset.pattern.permute.xlu0 0
  %218 = vperm.xlu0 %217, %v209
  %v219 = vpop.permute.xlu0 %218
  %v222 = vsel %vm30, %v215, 0
  %224 = vmatprep.subr.mxu0 %v29
  %225 = vmatpush1.msra.mxu0 %v28
  %226 = vmatprep.subr.mxu0 0.0
  %227 = vmatpush1.msra.mxu0 0.0
  %228 = vmatprep.subr.mxu0 0.0
  %229 = vmatpush1.msra.mxu0 0.0
  %230 = vmatprep.subr.mxu0 0.0
  %231 = vmatpush1.msra.mxu0 0.0
  %232 = vmatprep.subr.mxu0 0.0
  %233 = vmatpush1.msra.mxu0 0.0
  %234 = vmatprep.subr.mxu0 0.0
  %235 = vmatpush1.msra.mxu0 0.0
  %236 = vmatprep.subr.mxu0 0.0
  %237 = vmatpush1.msra.mxu0 0.0
  %238 = vmatprep.subr.mxu0 0.0
  %239 = vmatpush1.msra.mxu0 0.0
  %240 = vmatprep.subr.mxu0 0.0
  %241 = vmatpush1.msra.mxu0 0.0
  %242 = vmatprep.subr.mxu0 0.0
  %243 = vmatpush1.msra.mxu0 0.0
  %244 = vmatprep.subr.mxu0 0.0
  %245 = vmatpush1.msra.mxu0 0.0
  %246 = vmatprep.subr.mxu0 0.0
  %247 = vmatpush1.msra.mxu0 0.0
  %248 = vmatprep.subr.mxu0 0.0
  %249 = vmatpush1.msra.mxu0 0.0
  %250 = vmatprep.subr.mxu0 0.0
  %251 = vmatpush1.msra.mxu0 0.0
  %252 = vmatprep.subr.mxu0 0.0
  %253 = vmatpush1.msra.mxu0 0.0
  %254 = vmatprep.subr.mxu0 0.0
  %255 = vmatpush1.msra.mxu0 0.0
  %256 = vmatprep.subr.mxu0 0.0
  %257 = vmatpush1.msra.mxu0 0.0
  %258 = vmatprep.subr.mxu0 0.0
  %259 = vmatpush1.msra.mxu0 0.0
  %260 = vmatprep.subr.mxu0 0.0
  %261 = vmatpush1.msra.mxu0 0.0
  %262 = vmatprep.subr.mxu0 0.0
  %263 = vmatpush1.msra.mxu0 0.0
  %264 = vmatprep.subr.mxu0 0.0
  %265 = vmatpush1.msra.mxu0 0.0
  %266 = vmatprep.subr.mxu0 0.0
  %267 = vmatpush1.msra.mxu0 0.0
  %268 = vmatprep.subr.mxu0 0.0
  %269 = vmatpush1.msra.mxu0 0.0
  %270 = vmatprep.subr.mxu0 0.0
  %271 = vmatpush1.msra.mxu0 0.0
  %272 = vmatprep.subr.mxu0 0.0
  %273 = vmatpush1.msra.mxu0 0.0
  %274 = vmatprep.subr.mxu0 0.0
  %275 = vmatpush1.msra.mxu0 0.0
  %276 = vmatprep.subr.mxu0 0.0
  %277 = vmatpush1.msra.mxu0 0.0
  %278 = vmatprep.subr.mxu0 0.0
  %279 = vmatpush1.msra.mxu0 0.0
  %280 = vmatprep.subr.mxu0 0.0
  %281 = vmatpush1.msra.mxu0 0.0
  %282 = vmatprep.subr.mxu0 0.0
  %283 = vmatpush1.msra.mxu0 0.0
  %284 = vmatprep.subr.mxu0 0.0
  %285 = vmatpush1.msra.mxu0 0.0
  %286 = vmatprep.subr.mxu0 0.0
  %287 = vmatpush1.msra.mxu0 0.0
  %288 = vmatprep.mubr.f32.mxu0 0.0
  %289 = vmatmul.mubr.f32.gmra.mrb[0].mxu0 %v222
  %v290 = vpop.f32.mrb[0].mxu0
  %v291 = vadd.f32 %v219, %v290
  %v292 = vpop.f32.mrb[0].mxu0
  %v293 = vadd.f32 %v219, %v292
  %294 = vdwg.mxu0
  %v295 = vmax.f32 %v291, 0.0
  %v296 = vmax.f32 %v293, 0.0
  %v298 = vsel %vm30, %v27, 0
  %300 = vmatprep.subr.mxu0 %v296
  %301 = vmatpush1.msra.mxu0 %v295
  %302 = vmatprep.subr.mxu0 0.0
  %303 = vmatpush1.msra.mxu0 0.0
  %304 = vmatprep.subr.mxu0 0.0
  %305 = vmatpush1.msra.mxu0 0.0
  %306 = vmatprep.subr.mxu0 0.0
  %307 = vmatpush1.msra.mxu0 0.0
  %308 = vmatprep.subr.mxu0 0.0
  %309 = vmatpush1.msra.mxu0 0.0
  %310 = vmatprep.subr.mxu0 0.0
  %311 = vmatpush1.msra.mxu0 0.0
  %312 = vmatprep.subr.mxu0 0.0
  %313 = vmatpush1.msra.mxu0 0.0
  %314 = vmatprep.subr.mxu0 0.0
  %315 = vmatpush1.msra.mxu0 0.0
  %316 = vmatprep.subr.mxu0 0.0
  %317 = vmatpush1.msra.mxu0 0.0
  %318 = vmatprep.subr.mxu0 0.0
  %319 = vmatpush1.msra.mxu0 0.0
  %320 = vmatprep.subr.mxu0 0.0
  %321 = vmatpush1.msra.mxu0 0.0
  %322 = vmatprep.subr.mxu0 0.0
  %323 = vmatpush1.msra.mxu0 0.0
  %324 = vmatprep.subr.mxu0 0.0
  %325 = vmatpush1.msra.mxu0 0.0
  %326 = vmatprep.subr.mxu0 0.0
  %327 = vmatpush1.msra.mxu0 0.0
  %328 = vmatprep.subr.mxu0 0.0
  %329 = vmatpush1.msra.mxu0 0.0
  %330 = vmatprep.subr.mxu0 0.0
  %331 = vmatpush1.msra.mxu0 0.0
  %332 = vmatprep.subr.mxu0 0.0
  %333 = vmatpush1.msra.mxu0 0.0
  %334 = vmatprep.subr.mxu0 0.0
  %335 = vmatpush1.msra.mxu0 0.0
  %336 = vmatprep.subr.mxu0 0.0
  %337 = vmatpush1.msra.mxu0 0.0
  %338 = vmatprep.subr.mxu0 0.0
  %339 = vmatpush1.msra.mxu0 0.0
  %340 = vmatprep.subr.mxu0 0.0
  %341 = vmatpush1.msra.mxu0 0.0
  %342 = vmatprep.subr.mxu0 0.0
  %343 = vmatpush1.msra.mxu0 0.0
  %344 = vmatprep.subr.mxu0 0.0
  %345 = vmatpush1.msra.mxu0 0.0
  %346 = vmatprep.subr.mxu0 0.0
  %347 = vmatpush1.msra.mxu0 0.0
  %348 = vmatprep.subr.mxu0 0.0
  %349 = vmatpush1.msra.mxu0 0.0
  %350 = vmatprep.subr.mxu0 0.0
  %351 = vmatpush1.msra.mxu0 0.0
  %352 = vmatprep.subr.mxu0 0.0
  %353 = vmatpush1.msra.mxu0 0.0
  %354 = vmatprep.subr.mxu0 0.0
  %355 = vmatpush1.msra.mxu0 0.0
  %356 = vmatprep.subr.mxu0 0.0
  %357 = vmatpush1.msra.mxu0 0.0
  %358 = vmatprep.subr.mxu0 0.0
  %359 = vmatpush1.msra.mxu0 0.0
  %360 = vmatprep.subr.mxu0 0.0
  %361 = vmatpush1.msra.mxu0 0.0
  %362 = vmatprep.subr.mxu0 0.0
  %363 = vmatpush1.msra.mxu0 0.0
  %364 = vmatprep.mubr.f32.mxu0 0.0
  %365 = vmatmul.mubr.f32.gmra.mrb[0].mxu0 %v298
  %v366 = vpop.f32.mrb[0].mxu0
  %v367 = vadd.f32 0.0, %v366
  %v368 = vpop.f32.mrb[0].mxu0
  %v369 = vadd.f32 0.0, %v368
  %370 = vdwg.mxu0
  %v371 = vadd.f32 %v367, %v369
  %372 = vadd.xlane.f32.xlu0 %v371
  %v373 = vpop.xlane.xlu0 %372
  %v374 = vadd.f32 %v373, 0.0
  %v375 = vmul.f32 %v367, %v367
  %v376 = vmul.f32 %v369, %v369
  %v377 = vadd.f32 %v375, %v376
  %378 = vadd.xlane.f32.xlu0 %v377
  %v379 = vpop.xlane.xlu0 %378
  %v380 = vadd.f32 %v379, 0.0
  %381 = vmatprep.subr.mxu0 %v117
  %382 = vmatpush1.msra.mxu0 %v116
  %383 = vmatprep.subr.mxu0 0.0
  %384 = vmatpush1.msra.mxu0 0.0
  %385 = vmatprep.subr.mxu0 0.0
  %386 = vmatpush1.msra.mxu0 0.0
  %387 = vmatprep.subr.mxu0 0.0
  %388 = vmatpush1.msra.mxu0 0.0
  %389 = vmatprep.subr.mxu0 0.0
  %390 = vmatpush1.msra.mxu0 0.0
  %391 = vmatprep.subr.mxu0 0.0
  %392 = vmatpush1.msra.mxu0 0.0
  %393 = vmatprep.subr.mxu0 0.0
  %394 = vmatpush1.msra.mxu0 0.0
  %395 = vmatprep.subr.mxu0 0.0
  %396 = vmatpush1.msra.mxu0 0.0
  %397 = vmatprep.subr.mxu0 0.0
  %398 = vmatpush1.msra.mxu0 0.0
  %399 = vmatprep.subr.mxu0 0.0
  %400 = vmatpush1.msra.mxu0 0.0
  %401 = vmatprep.subr.mxu0 0.0
  %402 = vmatpush1.msra.mxu0 0.0
  %403 = vmatprep.subr.mxu0 0.0
  %404 = vmatpush1.msra.mxu0 0.0
  %405 = vmatprep.subr.mxu0 0.0
  %406 = vmatpush1.msra.mxu0 0.0
  %407 = vmatprep.subr.mxu0 0.0
  %408 = vmatpush1.msra.mxu0 0.0
  %409 = vmatprep.subr.mxu0 0.0
  %410 = vmatpush1.msra.mxu0 0.0
  %411 = vmatprep.subr.mxu0 0.0
  %412 = vmatpush1.msra.mxu0 0.0
  %413 = vmatprep.subr.mxu0 0.0
  %414 = vmatpush1.msra.mxu0 0.0
  %415 = vmatprep.subr.mxu0 0.0
  %416 = vmatpush1.msra.mxu0 0.0
  %417 = vmatprep.subr.mxu0 0.0
  %418 = vmatpush1.msra.mxu0 0.0
  %419 = vmatprep.subr.mxu0 0.0
  %420 = vmatpush1.msra.mxu0 0.0
  %421 = vmatprep.subr.mxu0 0.0
  %422 = vmatpush1.msra.mxu0 0.0
  %423 = vmatprep.subr.mxu0 0.0
  %424 = vmatpush1.msra.mxu0 0.0
  %425 = vmatprep.subr.mxu0 0.0
  %426 = vmatpush1.msra.mxu0 0.0
  %427 = vmatprep.subr.mxu0 0.0
  %428 = vmatpush1.msra.mxu0 0.0
  %429 = vmatprep.subr.mxu0 0.0
  %430 = vmatpush1.msra.mxu0 0.0
  %431 = vmatprep.subr.mxu0 0.0
  %432 = vmatpush1.msra.mxu0 0.0
  %433 = vmatprep.subr.mxu0 0.0
  %434 = vmatpush1.msra.mxu0 0.0
  %435 = vmatprep.subr.mxu0 0.0
  %436 = vmatpush1.msra.mxu0 0.0
  %437 = vmatprep.subr.mxu0 0.0
  %438 = vmatpush1.msra.mxu0 0.0
  %439 = vmatprep.subr.mxu0 0.0
  %440 = vmatpush1.msra.mxu0 0.0
  %441 = vmatprep.subr.mxu0 0.0
  %442 = vmatpush1.msra.mxu0 0.0
  %443 = vmatprep.subr.mxu0 0.0
  %444 = vmatpush1.msra.mxu0 0.0
  %445 = vmatprep.mubr.f32.mxu0 0.0
  %446 = vmatmul.mubr.f32.gmra.mrb[0].mxu0 %v222
  %v447 = vpop.f32.mrb[0].mxu0
  %v448 = vadd.f32 %v219, %v447
  %v449 = vpop.f32.mrb[0].mxu0
  %v450 = vadd.f32 %v219, %v449
  %451 = vdwg.mxu0
  %v452 = vmax.f32 %v448, 0.0
  %v453 = vmax.f32 %v450, 0.0
  %454 = vmatprep.subr.mxu0 %v453
  %455 = vmatpush1.msra.mxu0 %v452
  %456 = vmatprep.subr.mxu0 0.0
  %457 = vmatpush1.msra.mxu0 0.0
  %458 = vmatprep.subr.mxu0 0.0
  %459 = vmatpush1.msra.mxu0 0.0
  %460 = vmatprep.subr.mxu0 0.0
  %461 = vmatpush1.msra.mxu0 0.0
  %462 = vmatprep.subr.mxu0 0.0
  %463 = vmatpush1.msra.mxu0 0.0
  %464 = vmatprep.subr.mxu0 0.0
  %465 = vmatpush1.msra.mxu0 0.0
  %466 = vmatprep.subr.mxu0 0.0
  %467 = vmatpush1.msra.mxu0 0.0
  %468 = vmatprep.subr.mxu0 0.0
  %469 = vmatpush1.msra.mxu0 0.0
  %470 = vmatprep.subr.mxu0 0.0
  %471 = vmatpush1.msra.mxu0 0.0
  %472 = vmatprep.subr.mxu0 0.0
  %473 = vmatpush1.msra.mxu0 0.0
  %474 = vmatprep.subr.mxu0 0.0
  %475 = vmatpush1.msra.mxu0 0.0
  %476 = vmatprep.subr.mxu0 0.0
  %477 = vmatpush1.msra.mxu0 0.0
  %478 = vmatprep.subr.mxu0 0.0
  %479 = vmatpush1.msra.mxu0 0.0
  %480 = vmatprep.subr.mxu0 0.0
  %481 = vmatpush1.msra.mxu0 0.0
  %482 = vmatprep.subr.mxu0 0.0
  %483 = vmatpush1.msra.mxu0 0.0
  %484 = vmatprep.subr.mxu0 0.0
  %485 = vmatpush1.msra.mxu0 0.0
  %486 = vmatprep.subr.mxu0 0.0
  %487 = vmatpush1.msra.mxu0 0.0
  %488 = vmatprep.subr.mxu0 0.0
  %489 = vmatpush1.msra.mxu0 0.0
  %490 = vmatprep.subr.mxu0 0.0
  %491 = vmatpush1.msra.mxu0 0.0
  %492 = vmatprep.subr.mxu0 0.0
  %493 = vmatpush1.msra.mxu0 0.0
  %494 = vmatprep.subr.mxu0 0.0
  %495 = vmatpush1.msra.mxu0 0.0
  %496 = vmatprep.subr.mxu0 0.0
  %497 = vmatpush1.msra.mxu0 0.0
  %498 = vmatprep.subr.mxu0 0.0
  %499 = vmatpush1.msra.mxu0 0.0
  %500 = vmatprep.subr.mxu0 0.0
  %501 = vmatpush1.msra.mxu0 0.0
  %502 = vmatprep.subr.mxu0 0.0
  %503 = vmatpush1.msra.mxu0 0.0
  %504 = vmatprep.subr.mxu0 0.0
  %505 = vmatpush1.msra.mxu0 0.0
  %506 = vmatprep.subr.mxu0 0.0
  %507 = vmatpush1.msra.mxu0 0.0
  %508 = vmatprep.subr.mxu0 0.0
  %509 = vmatpush1.msra.mxu0 0.0
  %510 = vmatprep.subr.mxu0 0.0
  %511 = vmatpush1.msra.mxu0 0.0
  %512 = vmatprep.subr.mxu0 0.0
  %513 = vmatpush1.msra.mxu0 0.0
  %514 = vmatprep.subr.mxu0 0.0
  %515 = vmatpush1.msra.mxu0 0.0
  %516 = vmatprep.subr.mxu0 0.0
  %517 = vmatpush1.msra.mxu0 0.0
  %518 = vmatprep.mubr.f32.mxu0 0.0
  %519 = vmatmul.mubr.f32.gmra.mrb[0].mxu0 %v298
  %v520 = vpop.f32.mrb[0].mxu0
  %v521 = vadd.f32 0.0, %v520
  %v522 = vpop.f32.mrb[0].mxu0
  %v523 = vadd.f32 0.0, %v522
  %524 = vdwg.mxu0
  %v525 = vadd.f32 %v521, %v523
  %526 = vadd.xlane.f32.xlu0 %v525
  %v527 = vpop.xlane.xlu0 %526
  %v528 = vadd.f32 %v374, %v527
  %v529 = vmul.f32 %v521, %v521
  %v530 = vmul.f32 %v523, %v523
  %v531 = vadd.f32 %v529, %v530
  %532 = vadd.xlane.f32.xlu0 %v531
  %v533 = vpop.xlane.xlu0 %532
  %v534 = vadd.f32 %v380, %v533
  %v535 = vmul.f32 %v528, 0.001953125
  %v536 = vmul.f32 %v534, 0.001953125
  %v537 = vmul.f32 %v535, %v535
  %v538 = vsub.f32 %v536, %v537
  %v539 = vld [vmem:[%s5] sm:$0xff]
  %v540 = vadd.f32 %v538, 1e-05
  %v541 = vrsqrt.pop %v540
  %v542 = vmul.f32 %v539, %v541
  %v543 = vld [vmem:[%s6] sm:$0xff]
  %v544 = vmul.f32 %v535, %v542
  %v545 = vsub.f32 %v543, %v544
  %547 = vset.pattern.permute.xlu0 0
  %548 = vperm.xlu0 %547, %v542
  %v549 = vpop.permute.xlu0 %548
  %v551 = vmul.f32 %v27, %v549
  %553 = vset.pattern.permute.xlu0 0
  %554 = vperm.xlu0 %553, %v545
  %v555 = vpop.permute.xlu0 %554
  %v558 = vsel %vm30, %v551, 0
  %560 = vmatprep.subr.mxu0 %v296
  %561 = vmatpush1.msra.mxu0 %v295
  %562 = vmatprep.subr.mxu0 0.0
  %563 = vmatpush1.msra.mxu0 0.0
  %564 = vmatprep.subr.mxu0 0.0
  %565 = vmatpush1.msra.mxu0 0.0
  %566 = vmatprep.subr.mxu0 0.0
  %567 = vmatpush1.msra.mxu0 0.0
  %568 = vmatprep.subr.mxu0 0.0
  %569 = vmatpush1.msra.mxu0 0.0
  %570 = vmatprep.subr.mxu0 0.0
  %571 = vmatpush1.msra.mxu0 0.0
  %572 = vmatprep.subr.mxu0 0.0
  %573 = vmatpush1.msra.mxu0 0.0
  %574 = vmatprep.subr.mxu0 0.0
  %575 = vmatpush1.msra.mxu0 0.0
  %576 = vmatprep.subr.mxu0 0.0
  %577 = vmatpush1.msra.mxu0 0.0
  %578 = vmatprep.subr.mxu0 0.0
  %579 = vmatpush1.msra.mxu0 0.0
  %580 = vmatprep.subr.mxu0 0.0
  %581 = vmatpush1.msra.mxu0 0.0
  %582 = vmatprep.subr.mxu0 0.0
  %583 = vmatpush1.msra.mxu0 0.0
  %584 = vmatprep.subr.mxu0 0.0
  %585 = vmatpush1.msra.mxu0 0.0
  %586 = vmatprep.subr.mxu0 0.0
  %587 = vmatpush1.msra.mxu0 0.0
  %588 = vmatprep.subr.mxu0 0.0
  %589 = vmatpush1.msra.mxu0 0.0
  %590 = vmatprep.subr.mxu0 0.0
  %591 = vmatpush1.msra.mxu0 0.0
  %592 = vmatprep.subr.mxu0 0.0
  %593 = vmatpush1.msra.mxu0 0.0
  %594 = vmatprep.subr.mxu0 0.0
  %595 = vmatpush1.msra.mxu0 0.0
  %596 = vmatprep.subr.mxu0 0.0
  %597 = vmatpush1.msra.mxu0 0.0
  %598 = vmatprep.subr.mxu0 0.0
  %599 = vmatpush1.msra.mxu0 0.0
  %600 = vmatprep.subr.mxu0 0.0
  %601 = vmatpush1.msra.mxu0 0.0
  %602 = vmatprep.subr.mxu0 0.0
  %603 = vmatpush1.msra.mxu0 0.0
  %604 = vmatprep.subr.mxu0 0.0
  %605 = vmatpush1.msra.mxu0 0.0
  %606 = vmatprep.subr.mxu0 0.0
  %607 = vmatpush1.msra.mxu0 0.0
  %608 = vmatprep.subr.mxu0 0.0
  %609 = vmatpush1.msra.mxu0 0.0
  %610 = vmatprep.subr.mxu0 0.0
  %611 = vmatpush1.msra.mxu0 0.0
  %612 = vmatprep.subr.mxu0 0.0
  %613 = vmatpush1.msra.mxu0 0.0
  %614 = vmatprep.subr.mxu0 0.0
  %615 = vmatpush1.msra.mxu0 0.0
  %616 = vmatprep.subr.mxu0 0.0
  %617 = vmatpush1.msra.mxu0 0.0
  %618 = vmatprep.subr.mxu0 0.0
  %619 = vmatpush1.msra.mxu0 0.0
  %620 = vmatprep.subr.mxu0 0.0
  %621 = vmatpush1.msra.mxu0 0.0
  %622 = vmatprep.subr.mxu0 0.0
  %623 = vmatpush1.msra.mxu0 0.0
  %624 = vmatprep.mubr.f32.mxu0 0.0
  %625 = vmatmul.mubr.f32.gmra.mrb[0].mxu0 %v558
  %v626 = vpop.f32.mrb[0].mxu0
  %v627 = vadd.f32 %v555, %v626
  %v628 = vpop.f32.mrb[0].mxu0
  %v629 = vadd.f32 %v555, %v628
  %630 = vdwg.mxu0
  %v631 = vadd.f32 %v627, %v28
  %v632 = vadd.f32 %v629, %v29
  %633 = vst [vmem:[%s7] sm:$0xff] %v631
  %634 = vst [vmem:[%s7 + $0x8] sm:$0xff] %v632
  %v635 = vld [vmem:[%s115] sm:$0xff]
  %v636 = vld [vmem:[%s115 + $0x8] sm:$0xff]
  %637 = vmatprep.subr.mxu0 %v636
  %638 = vmatpush1.msra.mxu0 %v635
  %639 = vmatprep.subr.mxu0 0.0
  %640 = vmatpush1.msra.mxu0 0.0
  %641 = vmatprep.subr.mxu0 0.0
  %642 = vmatpush1.msra.mxu0 0.0
  %643 = vmatprep.subr.mxu0 0.0
  %644 = vmatpush1.msra.mxu0 0.0
  %645 = vmatprep.subr.mxu0 0.0
  %646 = vmatpush1.msra.mxu0 0.0
  %647 = vmatprep.subr.mxu0 0.0
  %648 = vmatpush1.msra.mxu0 0.0
  %649 = vmatprep.subr.mxu0 0.0
  %650 = vmatpush1.msra.mxu0 0.0
  %651 = vmatprep.subr.mxu0 0.0
  %652 = vmatpush1.msra.mxu0 0.0
  %653 = vmatprep.subr.mxu0 0.0
  %654 = vmatpush1.msra.mxu0 0.0
  %655 = vmatprep.subr.mxu0 0.0
  %656 = vmatpush1.msra.mxu0 0.0
  %657 = vmatprep.subr.mxu0 0.0
  %658 = vmatpush1.msra.mxu0 0.0
  %659 = vmatprep.subr.mxu0 0.0
  %660 = vmatpush1.msra.mxu0 0.0
  %661 = vmatprep.subr.mxu0 0.0
  %662 = vmatpush1.msra.mxu0 0.0
  %663 = vmatprep.subr.mxu0 0.0
  %664 = vmatpush1.msra.mxu0 0.0
  %665 = vmatprep.subr.mxu0 0.0
  %666 = vmatpush1.msra.mxu0 0.0
  %667 = vmatprep.subr.mxu0 0.0
  %668 = vmatpush1.msra.mxu0 0.0
  %669 = vmatprep.subr.mxu0 0.0
  %670 = vmatpush1.msra.mxu0 0.0
  %671 = vmatprep.subr.mxu0 0.0
  %672 = vmatpush1.msra.mxu0 0.0
  %673 = vmatprep.subr.mxu0 0.0
  %674 = vmatpush1.msra.mxu0 0.0
  %675 = vmatprep.subr.mxu0 0.0
  %676 = vmatpush1.msra.mxu0 0.0
  %677 = vmatprep.subr.mxu0 0.0
  %678 = vmatpush1.msra.mxu0 0.0
  %679 = vmatprep.subr.mxu0 0.0
  %680 = vmatpush1.msra.mxu0 0.0
  %681 = vmatprep.subr.mxu0 0.0
  %682 = vmatpush1.msra.mxu0 0.0
  %683 = vmatprep.subr.mxu0 0.0
  %684 = vmatpush1.msra.mxu0 0.0
  %685 = vmatprep.subr.mxu0 0.0
  %686 = vmatpush1.msra.mxu0 0.0
  %687 = vmatprep.subr.mxu0 0.0
  %688 = vmatpush1.msra.mxu0 0.0
  %689 = vmatprep.subr.mxu0 0.0
  %690 = vmatpush1.msra.mxu0 0.0
  %691 = vmatprep.subr.mxu0 0.0
  %692 = vmatpush1.msra.mxu0 0.0
  %693 = vmatprep.subr.mxu0 0.0
  %694 = vmatpush1.msra.mxu0 0.0
  %695 = vmatprep.subr.mxu0 0.0
  %696 = vmatpush1.msra.mxu0 0.0
  %697 = vmatprep.subr.mxu0 0.0
  %698 = vmatpush1.msra.mxu0 0.0
  %699 = vmatprep.subr.mxu0 0.0
  %700 = vmatpush1.msra.mxu0 0.0
  %701 = vmatprep.mubr.f32.mxu0 0.0
  %702 = vmatmul.mubr.f32.gmra.mrb[0].mxu0 %v222
  %v703 = vpop.f32.mrb[0].mxu0
  %v704 = vadd.f32 %v219, %v703
  %v705 = vpop.f32.mrb[0].mxu0
  %v706 = vadd.f32 %v219, %v705
  %707 = vdwg.mxu0
  %v708 = vmax.f32 %v704, 0.0
  %v709 = vmax.f32 %v706, 0.0
  %710 = vmatprep.subr.mxu0 %v709
  %711 = vmatpush1.msra.mxu0 %v708
  %712 = vmatprep.subr.mxu0 0.0
  %713 = vmatpush1.msra.mxu0 0.0
  %714 = vmatprep.subr.mxu0 0.0
  %715 = vmatpush1.msra.mxu0 0.0
  %716 = vmatprep.subr.mxu0 0.0
  %717 = vmatpush1.msra.mxu0 0.0
  %718 = vmatprep.subr.mxu0 0.0
  %719 = vmatpush1.msra.mxu0 0.0
  %720 = vmatprep.subr.mxu0 0.0
  %721 = vmatpush1.msra.mxu0 0.0
  %722 = vmatprep.subr.mxu0 0.0
  %723 = vmatpush1.msra.mxu0 0.0
  %724 = vmatprep.subr.mxu0 0.0
  %725 = vmatpush1.msra.mxu0 0.0
  %726 = vmatprep.subr.mxu0 0.0
  %727 = vmatpush1.msra.mxu0 0.0
  %728 = vmatprep.subr.mxu0 0.0
  %729 = vmatpush1.msra.mxu0 0.0
  %730 = vmatprep.subr.mxu0 0.0
  %731 = vmatpush1.msra.mxu0 0.0
  %732 = vmatprep.subr.mxu0 0.0
  %733 = vmatpush1.msra.mxu0 0.0
  %734 = vmatprep.subr.mxu0 0.0
  %735 = vmatpush1.msra.mxu0 0.0
  %736 = vmatprep.subr.mxu0 0.0
  %737 = vmatpush1.msra.mxu0 0.0
  %738 = vmatprep.subr.mxu0 0.0
  %739 = vmatpush1.msra.mxu0 0.0
  %740 = vmatprep.subr.mxu0 0.0
  %741 = vmatpush1.msra.mxu0 0.0
  %742 = vmatprep.subr.mxu0 0.0
  %743 = vmatpush1.msra.mxu0 0.0
  %744 = vmatprep.subr.mxu0 0.0
  %745 = vmatpush1.msra.mxu0 0.0
  %746 = vmatprep.subr.mxu0 0.0
  %747 = vmatpush1.msra.mxu0 0.0
  %748 = vmatprep.subr.mxu0 0.0
  %749 = vmatpush1.msra.mxu0 0.0
  %750 = vmatprep.subr.mxu0 0.0
  %751 = vmatpush1.msra.mxu0 0.0
  %752 = vmatprep.subr.mxu0 0.0
  %753 = vmatpush1.msra.mxu0 0.0
  %754 = vmatprep.subr.mxu0 0.0
  %755 = vmatpush1.msra.mxu0 0.0
  %756 = vmatprep.subr.mxu0 0.0
  %757 = vmatpush1.msra.mxu0 0.0
  %758 = vmatprep.subr.mxu0 0.0
  %759 = vmatpush1.msra.mxu0 0.0
  %760 = vmatprep.subr.mxu0 0.0
  %761 = vmatpush1.msra.mxu0 0.0
  %762 = vmatprep.subr.mxu0 0.0
  %763 = vmatpush1.msra.mxu0 0.0
  %764 = vmatprep.subr.mxu0 0.0
  %765 = vmatpush1.msra.mxu0 0.0
  %766 = vmatprep.subr.mxu0 0.0
  %767 = vmatpush1.msra.mxu0 0.0
  %768 = vmatprep.subr.mxu0 0.0
  %769 = vmatpush1.msra.mxu0 0.0
  %770 = vmatprep.subr.mxu0 0.0
  %771 = vmatpush1.msra.mxu0 0.0
  %772 = vmatprep.subr.mxu0 0.0
  %773 = vmatpush1.msra.mxu0 0.0
  %774 = vmatprep.mubr.f32.mxu0 0.0
  %775 = vmatmul.mubr.f32.gmra.mrb[0].mxu0 %v558
  %v776 = vpop.f32.mrb[0].mxu0
  %v777 = vadd.f32 %v555, %v776
  %v778 = vpop.f32.mrb[0].mxu0
  %v779 = vadd.f32 %v555, %v778
  %780 = vdwg.mxu0
  %v781 = vadd.f32 %v777, %v635
  %v782 = vadd.f32 %v779, %v636
  %s783 = scalar_lea.vmem %s7, 16
  %784 = vst [vmem:[%s783] sm:$0xff] %v781
  %785 = vst [vmem:[%s783 + $0x8] sm:$0xff] %v782
  // Predicated region
  $region30: #{ru_forward.1} parent=0 // pred_check
    _
  $region31: #{ru_forward.1} parent=0 // pred_check_branch
    %787 = sbr.rel (0) target = $region33
  $region32: #{ru_forward.1} parent=0 // pred_region
    _
  $region33: #{ru_forward.1} parent=0 // pred_fallthru
    _
  // Predicated region
  $region34: #{ru_forward.1} parent=0 // pred_check
    _
  $region35: #{ru_forward.1} parent=0 // pred_check_branch
    %789 = sbr.rel (0) target = $region37
  $region36: #{ru_forward.1} parent=0 // pred_region
    _
  $region37: #{ru_forward.1} parent=0 // pred_fallthru
    _

</llo_original>
